<compile_context>
chip_gen: v7x
topology: tpu7x:2x2x1
jax: 0.10.0
libtpu: 0.0.40
codegen_flags: <defaults>
</compile_context>

<pallas_src>
import functools

import jax
import jax.numpy as jnp
from jax import lax
from jax.experimental import pallas as pl
from jax.experimental.pallas import tpu as pltpu

SCALE = 0.5
DROP_P = 0.5


def _attn_kernel(*refs, training):
    """Batched attention over a (G, S, D) head-group block."""
    if training:
        mask_ref, q_ref, k_ref, v_ref, o_ref = refs
    else:
        q_ref, k_ref, v_ref, o_ref = refs

    # Fold the 0.5 softmax scale into Q (G*S*D elements instead of G*S*S).
    q = q_ref[...] * SCALE        # (G, S, D)
    k = k_ref[...]                # (G, S, D)
    v = v_ref[...]                # (G, S, D)

    # scores = Q @ K^T, contracting on D with batch dim G -- no explicit
    # transpose materialized.
    qk = lax.dot_general(
        q, k, (((2,), (2,)), ((0,), (0,))),
        preferred_element_type=jnp.float32)            # (G, S, S)

    # Numerically stable softmax, normalization deferred past the PV matmul.
    m = jnp.max(qk, axis=-1, keepdims=True)            # (G, S, 1)
    e = jnp.exp(qk - m)                                 # unnormalized probs
    denom = jnp.sum(e, axis=-1, keepdims=True)          # (G, S, 1)

    if training:
        # Drop entries of the UNnormalized probs; the 1/(1-p) rescale is
        # folded into the deferred per-row normalization below.
        e = e * mask_ref[...]

    # (G, S, S) @ (G, S, D) contracting on the key axis.
    pv = lax.dot_general(
        e, v, (((2,), (1,)), ((0,), (0,))),
        preferred_element_type=jnp.float32)             # (G, S, D)

    keep_scale = (1.0 / (1.0 - DROP_P)) if training else 1.0
    o_ref[...] = (pv * (keep_scale / denom)).astype(o_ref.dtype)


def _pick_group(bh, s, d, bytes_per=4, budget=4 * 1024 * 1024):
    """Largest divisor G of BH whose double-buffered block set fits `budget`."""
    def footprint(g):
        # q, k, v, o blocks (g*s*d each) + mask block (g*s*s), x2 double-buffer
        return 2 * bytes_per * (4 * g * s * d + g * s * s)

    g = bh
    while g > 1 and (bh % g != 0 or footprint(g) > budget):
        g -= 1
    return max(g, 1)


def sdpa_dropout(query, key, value, *, rng_key=None, training=True):
    """query/key/value: (B, H, S, D) float32. Returns (B, H, S, D)."""
    B, H, S, D = query.shape
    BH = B * H
    q = query.reshape(BH, S, D)
    k = key.reshape(BH, S, D)
    v = value.reshape(BH, S, D)

    G = _pick_group(BH, S, D)
    grid = (BH // G,)

    kernel = functools.partial(_attn_kernel, training=training)

    qkv_spec = pl.BlockSpec((G, S, D), lambda i: (i, 0, 0))
    in_specs = [qkv_spec, qkv_spec, qkv_spec]
    args = [q, k, v]

    if training:
        if rng_key is None:
            rng_key = jax.random.PRNGKey(0)
        # Keep-mask (1.0 = keep) generated once per call; portable across
        # TPU / interpret backends.  Deterministic given rng_key.
        mask = jax.random.bernoulli(
            rng_key, 1.0 - DROP_P, (BH, S, S)).astype(q.dtype)
        in_specs = [pl.BlockSpec((G, S, S), lambda i: (i, 0, 0))] + in_specs
        args = [mask] + args

    out = pl.pallas_call(
        kernel,
        out_shape=jax.ShapeDtypeStruct((BH, S, D), query.dtype),
        grid=grid,
        in_specs=in_specs,
        out_specs=pl.BlockSpec((G, S, D), lambda i: (i, 0, 0)),
        compiler_params=pltpu.CompilerParams(
            dimension_semantics=("parallel",),   # head-groups are independent
        ),
    )(*args)

    return out.reshape(B, H, S, D)


if __name__ == "__main__":
    B, H, S, D = 2, 4, 8, 16
    root = jax.random.PRNGKey(0)
    kq, kk, kv, kd = jax.random.split(root, 4)
    query = jax.random.normal(kq, (B, H, S, D), dtype=jnp.float32)
    key = jax.random.normal(kk, (B, H, S, D), dtype=jnp.float32)
    value = jax.random.normal(kv, (B, H, S, D), dtype=jnp.float32)

    # Training path (dropout active).
    out = sdpa_dropout(query, key, value, rng_key=kd, training=True)
    jax.block_until_ready(out)

    # Reference (pure JAX) checks.
    qk = jnp.einsum("bhsd,bhtd->bhst", query, key) * SCALE
    probs = jax.nn.softmax(qk, axis=-1)

    # Eval path (dropout = identity).
    out_eval = sdpa_dropout(query, key, value, training=False)
    ref_eval = jnp.einsum("bhst,bhtd->bhsd", probs, value)
    assert jnp.allclose(out_eval, ref_eval, atol=1e-5, rtol=1e-5)

    # Training path against a reference built with the same mask.
    mask = jax.random.bernoulli(kd, 1.0 - DROP_P, (B * H, S, S)).astype(
        jnp.float32).reshape(B, H, S, S)
    ref_train = jnp.einsum(
        "bhst,bhtd->bhsd", probs * mask * (1.0 / (1.0 - DROP_P)), value)
    assert jnp.allclose(out, ref_train, atol=1e-5, rtol=1e-5)

    print("KERNEL_OK")
</pallas_src>

<mosaic_0001>
module attributes {stable_mosaic.version = 11 : i64} {
  func.func @_attn_kernel(%arg0: i32, %arg1: memref<8x8x8xf32, #tpu.memory_space<vmem>>, %arg2: memref<8x8x16xf32, #tpu.memory_space<vmem>>, %arg3: memref<8x8x16xf32, #tpu.memory_space<vmem>>, %arg4: memref<8x8x16xf32, #tpu.memory_space<vmem>>, %arg5: memref<8x8x16xf32, #tpu.memory_space<vmem>>) attributes {dimension_semantics = [#tpu.dimension_semantics<parallel>], iteration_bounds = array<i64: 1>, scalar_prefetch = 0 : i64, scratch_operands = 0 : i64, tpu.core_type = #tpu.core_type<tc>, window_params = [{transform_indices = @transform_0, window_bounds = array<i64: 8, 8, 8>}, {transform_indices = @transform_1, window_bounds = array<i64: 8, 8, 16>}, {transform_indices = @transform_2, window_bounds = array<i64: 8, 8, 16>}, {transform_indices = @transform_3, window_bounds = array<i64: 8, 8, 16>}, {transform_indices = @transform_4, window_bounds = array<i64: 8, 8, 16>}]} {
    %c0 = arith.constant 0 : index
    %c0_0 = arith.constant 0 : index
    %c0_1 = arith.constant 0 : index
    %0 = vector.load %arg2[%c0, %c0_0, %c0_1] : memref<8x8x16xf32, #tpu.memory_space<vmem>>, vector<8x8x16xf32>
    %cst = arith.constant 5.000000e-01 : f32
    %1 = vector.broadcast %cst : f32 to vector<8x8x16xf32>
    %2 = arith.mulf %0, %1 : vector<8x8x16xf32>
    %c0_2 = arith.constant 0 : index
    %c0_3 = arith.constant 0 : index
    %c0_4 = arith.constant 0 : index
    %3 = vector.load %arg3[%c0_2, %c0_3, %c0_4] : memref<8x8x16xf32, #tpu.memory_space<vmem>>, vector<8x8x16xf32>
    %c0_5 = arith.constant 0 : index
    %c0_6 = arith.constant 0 : index
    %c0_7 = arith.constant 0 : index
    %4 = vector.load %arg4[%c0_5, %c0_6, %c0_7] : memref<8x8x16xf32, #tpu.memory_space<vmem>>, vector<8x8x16xf32>
    %cst_8 = arith.constant dense<0.000000e+00> : vector<8x8x8xf32>
    %5 = tpu.matmul %2, %3, %cst_8 {dimension_numbers = #tpu.dot_dimension_numbers<[2], [2], [1], [1], [0, 0, 0, 1, 1, 1], [0], [0]>} : vector<8x8x16xf32>, vector<8x8x16xf32>, vector<8x8x8xf32> -> vector<8x8x8xf32>
    %cst_9 = arith.constant dense<0xFF800000> : vector<8x8xf32>
    %6 = vector.multi_reduction <maximumf>, %5, %cst_9 [2] : vector<8x8x8xf32> to vector<8x8xf32>
    %7 = vector.shape_cast %6 : vector<8x8xf32> to vector<8x8x1xf32>
    %8 = vector.broadcast %7 : vector<8x8x1xf32> to vector<8x8x8xf32>
    %9 = arith.subf %5, %8 : vector<8x8x8xf32>
    %10 = math.exp %9 : vector<8x8x8xf32>
    %cst_10 = arith.constant dense<0.000000e+00> : vector<8x8xf32>
    %11 = vector.multi_reduction <add>, %10, %cst_10 [2] : vector<8x8x8xf32> to vector<8x8xf32>
    %12 = vector.shape_cast %11 : vector<8x8xf32> to vector<8x8x1xf32>
    %c0_11 = arith.constant 0 : index
    %c0_12 = arith.constant 0 : index
    %c0_13 = arith.constant 0 : index
    %13 = vector.load %arg1[%c0_11, %c0_12, %c0_13] : memref<8x8x8xf32, #tpu.memory_space<vmem>>, vector<8x8x8xf32>
    %14 = arith.mulf %10, %13 : vector<8x8x8xf32>
    %cst_14 = arith.constant dense<0.000000e+00> : vector<8x8x16xf32>
    %15 = tpu.matmul %14, %4, %cst_14 {dimension_numbers = #tpu.dot_dimension_numbers<[2], [1], [1], [2], [0, 0, 0, 1, 1, 2], [0], [0]>} : vector<8x8x8xf32>, vector<8x8x16xf32>, vector<8x8x16xf32> -> vector<8x8x16xf32>
    %cst_15 = arith.constant 2.000000e+00 : f32
    %16 = vector.broadcast %cst_15 : f32 to vector<8x8x1xf32>
    %17 = arith.divf %16, %12 : vector<8x8x1xf32>
    %18 = vector.broadcast %17 : vector<8x8x1xf32> to vector<8x8x16xf32>
    %19 = arith.mulf %15, %18 : vector<8x8x16xf32>
    %c0_16 = arith.constant 0 : index
    %c0_17 = arith.constant 0 : index
    %c0_18 = arith.constant 0 : index
    %20 = vector.load %arg5[%c0_16, %c0_17, %c0_18] : memref<8x8x16xf32, #tpu.memory_space<vmem>>, vector<8x8x16xf32>
    tpu.vector_store %arg5[%c0_16, %c0_17, %c0_18], %19 {strides = array<i32>} : memref<8x8x16xf32, #tpu.memory_space<vmem>>, vector<8x8x16xf32>,
    return
  }
  func.func @transform_0(%arg0: i32) -> (i32, i32, i32) {
    %c0_i32 = arith.constant 0 : i32
    %c0_i32_0 = arith.constant 0 : i32
    %c0_i32_1 = arith.constant 0 : i32
    return %arg0, %c0_i32, %c0_i32_0 : i32, i32, i32
  }
  func.func @transform_1(%arg0: i32) -> (i32, i32, i32) {
    %c0_i32 = arith.constant 0 : i32
    %c0_i32_0 = arith.constant 0 : i32
    %c0_i32_1 = arith.constant 0 : i32
    return %arg0, %c0_i32, %c0_i32_0 : i32, i32, i32
  }
  func.func @transform_2(%arg0: i32) -> (i32, i32, i32) {
    %c0_i32 = arith.constant 0 : i32
    %c0_i32_0 = arith.constant 0 : i32
    %c0_i32_1 = arith.constant 0 : i32
    return %arg0, %c0_i32, %c0_i32_0 : i32, i32, i32
  }
  func.func @transform_3(%arg0: i32) -> (i32, i32, i32) {
    %c0_i32 = arith.constant 0 : i32
    %c0_i32_0 = arith.constant 0 : i32
    %c0_i32_1 = arith.constant 0 : i32
    return %arg0, %c0_i32, %c0_i32_0 : i32, i32, i32
  }
  func.func @transform_4(%arg0: i32) -> (i32, i32, i32) {
    %c0_i32 = arith.constant 0 : i32
    %c0_i32_0 = arith.constant 0 : i32
    %c0_i32_1 = arith.constant 0 : i32
    return %arg0, %c0_i32, %c0_i32_0 : i32, i32, i32
  }
}

</mosaic_0001>

<llo_original>
// kernel: tpu_custom_call.1
$region0: #{tpu_custom_call.1}
  #allocation0 [shape = 'u32[]', space=smem, size = 0x4, offset = 0x4, fixed_abs, tag = 'smem constant byte address 0x4 - core index']
  #allocation1 [shape = 'u32[144,128]{1,0:T(1,128)}', space=vmem, size = 0x12000, scoped, tag = 'internal scratch']
  %s0 = inlined_call_operand.hbm [shape: f32[8,8,8], index: 0, kind: input, shape index: {}]
  %s1 = inlined_call_operand.hbm [shape: f32[8,8,16], index: 1, kind: input, shape index: {}]
  %s2 = inlined_call_operand.hbm [shape: f32[8,8,16], index: 2, kind: input, shape index: {}]
  %s3 = inlined_call_operand.hbm [shape: f32[8,8,16], index: 3, kind: input, shape index: {}]
  %s4 = inlined_call_operand.hbm [shape: f32[8,8,16], index: 4, kind: output, shape index: {}]
  %s5 = sld [smem:[#allocation0]]
  $region42: #{tpu_custom_call.1} parent=0
    _
  %s7 = ssub.s32 1, %s5
  %s8 = scalar_select 0, %s7, %s5
  $region1: #{tpu_custom_call.1} parent=0
    #allocation2 [shape = 'u8[32768]{0}', space=vmem, size = 0x8000, scoped, tag = 'input window, operand 0, single buffered']
    #allocation3 [shape = 's32[1]{0}', space=sflag, size = 0x4, scoped, tag = 'scoped memory for tpu_custom_call.1']
    #allocation4 [shape = 's32[1]{0}', space=sflag, size = 0x4, scoped, tag = 'scoped memory for tpu_custom_call.1']
    #allocation5 [shape = 'u8[32768]{0}', space=vmem, size = 0x8000, scoped, tag = 'input window, operand 1, single buffered']
    #allocation6 [shape = 's32[1]{0}', space=sflag, size = 0x4, scoped, tag = 'scoped memory for tpu_custom_call.1']
    #allocation7 [shape = 'u8[32768]{0}', space=vmem, size = 0x8000, scoped, tag = 'input window, operand 2, single buffered']
    #allocation8 [shape = 'u8[32768]{0}', space=vmem, size = 0x8000, scoped, tag = 'input window, operand 3, single buffered']
    #allocation9 [shape = 's32[1]{0}', space=sflag, size = 0x4, scoped, tag = 'scoped memory for tpu_custom_call.1']
    #allocation10 [shape = 'u8[32768]{0}', space=vmem, size = 0x8000, scoped, tag = 'output window, operand 0, single buffered']
    %9 = vsyncpa [#allocation3], 0
    %10 = vsyncpa [#allocation6], 0
    %11 = vsyncpa [#allocation9], 0
    %12 = vsyncpa [#allocation4], 0
    // Predicated region
    $region2: #{tpu_custom_call.1} parent=1 // pred_check
      _
    $region3: #{tpu_custom_call.1} parent=1 // pred_check_branch
      %14 = sbr.rel (0) target = $region5
    $region4: #{tpu_custom_call.1} parent=1 // pred_region
      %s16 = ssub.s32 1024, 1024
      %17 = vsyncadd [#allocation3], %s16
      %s18 = sshll.u32 [#allocation2], 4
      %s19 = int_to_ptr.vmem [resolvable:$true] %s18
      %24 = dma.hbm_to_vmem [thread:$0]  %s0, 1024, %s19, [#allocation3], 128, 128, 8
    $region5: #{tpu_custom_call.1} parent=1 // pred_fallthru
      _
    // Predicated region
    $region6: #{tpu_custom_call.1} parent=1 // pred_check
      _
    $region7: #{tpu_custom_call.1} parent=1 // pred_check_branch
      %26 = sbr.rel (0) target = $region9
    $region8: #{tpu_custom_call.1} parent=1 // pred_region
      %s28 = ssub.s32 1024, 1024
      %29 = vsyncadd [#allocation6], %s28
      %s30 = sshll.u32 [#allocation5], 4
      %s31 = int_to_ptr.vmem [resolvable:$true] %s30
      %36 = dma.hbm_to_vmem [thread:$0]  %s1, 1024, %s31, [#allocation6], 128, 128, 8
    $region9: #{tpu_custom_call.1} parent=1 // pred_fallthru
      _
    // Predicated region
    $region10: #{tpu_custom_call.1} parent=1 // pred_check
      _
    $region11: #{tpu_custom_call.1} parent=1 // pred_check_branch
      %38 = sbr.rel (0) target = $region13
    $region12: #{tpu_custom_call.1} parent=1 // pred_region
      %s40 = ssub.s32 1024, 1024
      %41 = vsyncadd [#allocation6], %s40
      %s42 = sshll.u32 [#allocation7], 4
      %s43 = int_to_ptr.vmem [resolvable:$true] %s42
      %48 = dma.hbm_to_vmem [thread:$0]  %s2, 1024, %s43, [#allocation6], 128, 128, 8
    $region13: #{tpu_custom_call.1} parent=1 // pred_fallthru
      _
    // Predicated region
    $region14: #{tpu_custom_call.1} parent=1 // pred_check
      _
    $region15: #{tpu_custom_call.1} parent=1 // pred_check_branch
      %50 = sbr.rel (0) target = $region17
    $region16: #{tpu_custom_call.1} parent=1 // pred_region
      %s52 = ssub.s32 1024, 1024
      %53 = vsyncadd [#allocation9], %s52
      %s54 = sshll.u32 [#allocation8], 4
      %s55 = int_to_ptr.vmem [resolvable:$true] %s54
      %60 = dma.hbm_to_vmem [thread:$0]  %s3, 1024, %s55, [#allocation9], 128, 128, 8
    $region17: #{tpu_custom_call.1} parent=1 // pred_fallthru
      _
    // Predicated region
    $region18: #{tpu_custom_call.1} parent=1 // pred_check
      _
    $region19: #{tpu_custom_call.1} parent=1 // pred_check_branch
      %62 = sbr.rel (0) target = $region21
    $region20: #{tpu_custom_call.1} parent=1 // pred_region
      %63 = dma.done [#allocation3], 1024
    $region21: #{tpu_custom_call.1} parent=1 // pred_fallthru
      _
    // Predicated region
    $region22: #{tpu_custom_call.1} parent=1 // pred_check
      _
    $region23: #{tpu_custom_call.1} parent=1 // pred_check_branch
      %65 = sbr.rel (0) target = $region25
    $region24: #{tpu_custom_call.1} parent=1 // pred_region
      %66 = dma.done [#allocation6], 1024
    $region25: #{tpu_custom_call.1} parent=1 // pred_fallthru
      _
    // Predicated region
    $region26: #{tpu_custom_call.1} parent=1 // pred_check
      _
    $region27: #{tpu_custom_call.1} parent=1 // pred_check_branch
      %68 = sbr.rel (0) target = $region29
    $region28: #{tpu_custom_call.1} parent=1 // pred_region
      %69 = dma.done [#allocation6], 1024
    $region29: #{tpu_custom_call.1} parent=1 // pred_fallthru
      _
    // Predicated region
    $region30: #{tpu_custom_call.1} parent=1 // pred_check
      _
    $region31: #{tpu_custom_call.1} parent=1 // pred_check_branch
      %71 = sbr.rel (0) target = $region33
    $region32: #{tpu_custom_call.1} parent=1 // pred_region
      %72 = dma.done [#allocation9], 1024
    $region33: #{tpu_custom_call.1} parent=1 // pred_fallthru
      _
    %v73 = vld [vmem:[#allocation5] sm:$0xff]
    %v74 = vld [vmem:[#allocation5 + $0x8] sm:$0xff]
    %v75 = vld [vmem:[#allocation5 + $0x10] sm:$0xff]
    %v76 = vld [vmem:[#allocation5 + $0x18] sm:$0xff]
    %v77 = vld [vmem:[#allocation5 + $0x20] sm:$0xff]
    %v78 = vld [vmem:[#allocation5 + $0x28] sm:$0xff]
    %v79 = vld [vmem:[#allocation5 + $0x30] sm:$0xff]
    %v80 = vld [vmem:[#allocation5 + $0x38] sm:$0xff]
    %v81 = vmul.f32 %v73, 0.5
    %v82 = vmul.f32 %v74, 0.5
    %v83 = vmul.f32 %v75, 0.5
    %v84 = vmul.f32 %v76, 0.5
    %v85 = vmul.f32 %v77, 0.5
    %v86 = vmul.f32 %v78, 0.5
    %v87 = vmul.f32 %v79, 0.5
    %v88 = vmul.f32 %v80, 0.5
    %v89 = vld [vmem:[#allocation7] sm:$0xff]
    %v90 = vld [vmem:[#allocation7 + $0x8] sm:$0xff]
    %v91 = vld [vmem:[#allocation7 + $0x10] sm:$0xff]
    %v92 = vld [vmem:[#allocation7 + $0x18] sm:$0xff]
    %v93 = vld [vmem:[#allocation7 + $0x20] sm:$0xff]
    %v94 = vld [vmem:[#allocation7 + $0x28] sm:$0xff]
    %v95 = vld [vmem:[#allocation7 + $0x30] sm:$0xff]
    %v96 = vld [vmem:[#allocation7 + $0x38] sm:$0xff]
    %v97 = vld [vmem:[#allocation8] sm:$0xff]
    %v98 = vld [vmem:[#allocation8 + $0x8] sm:$0xff]
    %v99 = vld [vmem:[#allocation8 + $0x10] sm:$0xff]
    %v100 = vld [vmem:[#allocation8 + $0x18] sm:$0xff]
    %v101 = vld [vmem:[#allocation8 + $0x20] sm:$0xff]
    %v102 = vld [vmem:[#allocation8 + $0x28] sm:$0xff]
    %v103 = vld [vmem:[#allocation8 + $0x30] sm:$0xff]
    %v104 = vld [vmem:[#allocation8 + $0x38] sm:$0xff]
    %vm105 = vcmask 130048
    %v107 = vsel %vm105, %v81, 0
    %v110 = vsel %vm105, %v89, 0
    %112 = vmatprep.subr.mxu0 0.0
    %113 = vmatpush1.xpose.msra.mxu0 %v110
    %114 = vmatprep.subr.mxu0 0.0
    %115 = vmatpush1.xpose.msra.mxu0 0.0
    %116 = vmatprep.subr.mxu0 0.0
    %117 = vmatpush1.xpose.msra.mxu0 0.0
    %118 = vmatprep.subr.mxu0 0.0
    %119 = vmatpush1.xpose.msra.mxu0 0.0
    %120 = vmatprep.subr.mxu0 0.0
    %121 = vmatpush1.xpose.msra.mxu0 0.0
    %122 = vmatprep.subr.mxu0 0.0
    %123 = vmatpush1.xpose.msra.mxu0 0.0
    %124 = vmatprep.subr.mxu0 0.0
    %125 = vmatpush1.xpose.msra.mxu0 0.0
    %126 = vmatprep.subr.mxu0 0.0
    %127 = vmatpush1.xpose.msra.mxu0 0.0
    %128 = vmatprep.subr.mxu0 0.0
    %129 = vmatpush1.xpose.msra.mxu0 0.0
    %130 = vmatprep.subr.mxu0 0.0
    %131 = vmatpush1.xpose.msra.mxu0 0.0
    %132 = vmatprep.subr.mxu0 0.0
    %133 = vmatpush1.xpose.msra.mxu0 0.0
    %134 = vmatprep.subr.mxu0 0.0
    %135 = vmatpush1.xpose.msra.mxu0 0.0
    %136 = vmatprep.subr.mxu0 0.0
    %137 = vmatpush1.xpose.msra.mxu0 0.0
    %138 = vmatprep.subr.mxu0 0.0
    %139 = vmatpush1.xpose.msra.mxu0 0.0
    %140 = vmatprep.subr.mxu0 0.0
    %141 = vmatpush1.xpose.msra.mxu0 0.0
    %142 = vmatprep.subr.mxu0 0.0
    %143 = vmatpush1.xpose.msra.mxu0 0.0
    %144 = vmatprep.subr.mxu0 0.0
    %145 = vmatpush1.xpose.msra.mxu0 0.0
    %146 = vmatprep.subr.mxu0 0.0
    %147 = vmatpush1.xpose.msra.mxu0 0.0
    %148 = vmatprep.subr.mxu0 0.0
    %149 = vmatpush1.xpose.msra.mxu0 0.0
    %150 = vmatprep.subr.mxu0 0.0
    %151 = vmatpush1.xpose.msra.mxu0 0.0
    %152 = vmatprep.subr.mxu0 0.0
    %153 = vmatpush1.xpose.msra.mxu0 0.0
    %154 = vmatprep.subr.mxu0 0.0
    %155 = vmatpush1.xpose.msra.mxu0 0.0
    %156 = vmatprep.subr.mxu0 0.0
    %157 = vmatpush1.xpose.msra.mxu0 0.0
    %158 = vmatprep.subr.mxu0 0.0
    %159 = vmatpush1.xpose.msra.mxu0 0.0
    %160 = vmatprep.subr.mxu0 0.0
    %161 = vmatpush1.xpose.msra.mxu0 0.0
    %162 = vmatprep.subr.mxu0 0.0
    %163 = vmatpush1.xpose.msra.mxu0 0.0
    %164 = vmatprep.subr.mxu0 0.0
    %165 = vmatpush1.xpose.msra.mxu0 0.0
    %166 = vmatprep.subr.mxu0 0.0
    %167 = vmatpush1.xpose.msra.mxu0 0.0
    %168 = vmatprep.subr.mxu0 0.0
    %169 = vmatpush1.xpose.msra.mxu0 0.0
    %170 = vmatprep.subr.mxu0 0.0
    %171 = vmatpush1.xpose.msra.mxu0 0.0
    %172 = vmatprep.subr.mxu0 0.0
    %173 = vmatpush1.xpose.msra.mxu0 0.0
    %174 = vmatprep.subr.mxu0 0.0
    %175 = vmatpush1.xpose.msra.mxu0 0.0
    %176 = vmatprep.mubr.f32.mxu0 0.0
    %177 = vmatmul.mubr.f32.gmra.mrb[0].mxu0 %v107
    %v178 = vpop.f32.mrb[0].mxu0
    %v179 = vadd.f32 0.0, %v178
    %v180 = vpop.f32.mrb[0].mxu0
    %181 = vdwg.mxu0
    %v183 = vsel %vm105, %v82, 0
    %v186 = vsel %vm105, %v90, 0
    %188 = vmatprep.subr.mxu0 0.0
    %189 = vmatpush1.xpose.msra.mxu0 %v186
    %190 = vmatprep.subr.mxu0 0.0
    %191 = vmatpush1.xpose.msra.mxu0 0.0
    %192 = vmatprep.subr.mxu0 0.0
    %193 = vmatpush1.xpose.msra.mxu0 0.0
    %194 = vmatprep.subr.mxu0 0.0
    %195 = vmatpush1.xpose.msra.mxu0 0.0
    %196 = vmatprep.subr.mxu0 0.0
    %197 = vmatpush1.xpose.msra.mxu0 0.0
    %198 = vmatprep.subr.mxu0 0.0
    %199 = vmatpush1.xpose.msra.mxu0 0.0
    %200 = vmatprep.subr.mxu0 0.0
    %201 = vmatpush1.xpose.msra.mxu0 0.0
    %202 = vmatprep.subr.mxu0 0.0
    %203 = vmatpush1.xpose.msra.mxu0 0.0
    %204 = vmatprep.subr.mxu0 0.0
    %205 = vmatpush1.xpose.msra.mxu0 0.0
    %206 = vmatprep.subr.mxu0 0.0
    %207 = vmatpush1.xpose.msra.mxu0 0.0
    %208 = vmatprep.subr.mxu0 0.0
    %209 = vmatpush1.xpose.msra.mxu0 0.0
    %210 = vmatprep.subr.mxu0 0.0
    %211 = vmatpush1.xpose.msra.mxu0 0.0
    %212 = vmatprep.subr.mxu0 0.0
    %213 = vmatpush1.xpose.msra.mxu0 0.0
    %214 = vmatprep.subr.mxu0 0.0
    %215 = vmatpush1.xpose.msra.mxu0 0.0
    %216 = vmatprep.subr.mxu0 0.0
    %217 = vmatpush1.xpose.msra.mxu0 0.0
    %218 = vmatprep.subr.mxu0 0.0
    %219 = vmatpush1.xpose.msra.mxu0 0.0
    %220 = vmatprep.subr.mxu0 0.0
    %221 = vmatpush1.xpose.msra.mxu0 0.0
    %222 = vmatprep.subr.mxu0 0.0
    %223 = vmatpush1.xpose.msra.mxu0 0.0
    %224 = vmatprep.subr.mxu0 0.0
    %225 = vmatpush1.xpose.msra.mxu0 0.0
    %226 = vmatprep.subr.mxu0 0.0
    %227 = vmatpush1.xpose.msra.mxu0 0.0
    %228 = vmatprep.subr.mxu0 0.0
    %229 = vmatpush1.xpose.msra.mxu0 0.0
    %230 = vmatprep.subr.mxu0 0.0
    %231 = vmatpush1.xpose.msra.mxu0 0.0
    %232 = vmatprep.subr.mxu0 0.0
    %233 = vmatpush1.xpose.msra.mxu0 0.0
    %234 = vmatprep.subr.mxu0 0.0
    %235 = vmatpush1.xpose.msra.mxu0 0.0
    %236 = vmatprep.subr.mxu0 0.0
    %237 = vmatpush1.xpose.msra.mxu0 0.0
    %238 = vmatprep.subr.mxu0 0.0
    %239 = vmatpush1.xpose.msra.mxu0 0.0
    %240 = vmatprep.subr.mxu0 0.0
    %241 = vmatpush1.xpose.msra.mxu0 0.0
    %242 = vmatprep.subr.mxu0 0.0
    %243 = vmatpush1.xpose.msra.mxu0 0.0
    %244 = vmatprep.subr.mxu0 0.0
    %245 = vmatpush1.xpose.msra.mxu0 0.0
    %246 = vmatprep.subr.mxu0 0.0
    %247 = vmatpush1.xpose.msra.mxu0 0.0
    %248 = vmatprep.subr.mxu0 0.0
    %249 = vmatpush1.xpose.msra.mxu0 0.0
    %250 = vmatprep.subr.mxu0 0.0
    %251 = vmatpush1.xpose.msra.mxu0 0.0
    %252 = vmatprep.mubr.f32.mxu0 0.0
    %253 = vmatmul.mubr.f32.gmra.mrb[0].mxu0 %v183
    %v254 = vpop.f32.mrb[0].mxu0
    %v255 = vadd.f32 0.0, %v254
    %v256 = vpop.f32.mrb[0].mxu0
    %257 = vdwg.mxu0
    %v259 = vsel %vm105, %v83, 0
    %v262 = vsel %vm105, %v91, 0
    %264 = vmatprep.subr.mxu0 0.0
    %265 = vmatpush1.xpose.msra.mxu0 %v262
    %266 = vmatprep.subr.mxu0 0.0
    %267 = vmatpush1.xpose.msra.mxu0 0.0
    %268 = vmatprep.subr.mxu0 0.0
    %269 = vmatpush1.xpose.msra.mxu0 0.0
    %270 = vmatprep.subr.mxu0 0.0
    %271 = vmatpush1.xpose.msra.mxu0 0.0
    %272 = vmatprep.subr.mxu0 0.0
    %273 = vmatpush1.xpose.msra.mxu0 0.0
    %274 = vmatprep.subr.mxu0 0.0
    %275 = vmatpush1.xpose.msra.mxu0 0.0
    %276 = vmatprep.subr.mxu0 0.0
    %277 = vmatpush1.xpose.msra.mxu0 0.0
    %278 = vmatprep.subr.mxu0 0.0
    %279 = vmatpush1.xpose.msra.mxu0 0.0
    %280 = vmatprep.subr.mxu0 0.0
    %281 = vmatpush1.xpose.msra.mxu0 0.0
    %282 = vmatprep.subr.mxu0 0.0
    %283 = vmatpush1.xpose.msra.mxu0 0.0
    %284 = vmatprep.subr.mxu0 0.0
    %285 = vmatpush1.xpose.msra.mxu0 0.0
    %286 = vmatprep.subr.mxu0 0.0
    %287 = vmatpush1.xpose.msra.mxu0 0.0
    %288 = vmatprep.subr.mxu0 0.0
    %289 = vmatpush1.xpose.msra.mxu0 0.0
    %290 = vmatprep.subr.mxu0 0.0
    %291 = vmatpush1.xpose.msra.mxu0 0.0
    %292 = vmatprep.subr.mxu0 0.0
    %293 = vmatpush1.xpose.msra.mxu0 0.0
    %294 = vmatprep.subr.mxu0 0.0
    %295 = vmatpush1.xpose.msra.mxu0 0.0
    %296 = vmatprep.subr.mxu0 0.0
    %297 = vmatpush1.xpose.msra.mxu0 0.0
    %298 = vmatprep.subr.mxu0 0.0
    %299 = vmatpush1.xpose.msra.mxu0 0.0
    %300 = vmatprep.subr.mxu0 0.0
    %301 = vmatpush1.xpose.msra.mxu0 0.0
    %302 = vmatprep.subr.mxu0 0.0
    %303 = vmatpush1.xpose.msra.mxu0 0.0
    %304 = vmatprep.subr.mxu0 0.0
    %305 = vmatpush1.xpose.msra.mxu0 0.0
    %306 = vmatprep.subr.mxu0 0.0
    %307 = vmatpush1.xpose.msra.mxu0 0.0
    %308 = vmatprep.subr.mxu0 0.0
    %309 = vmatpush1.xpose.msra.mxu0 0.0
    %310 = vmatprep.subr.mxu0 0.0
    %311 = vmatpush1.xpose.msra.mxu0 0.0
    %312 = vmatprep.subr.mxu0 0.0
    %313 = vmatpush1.xpose.msra.mxu0 0.0
    %314 = vmatprep.subr.mxu0 0.0
    %315 = vmatpush1.xpose.msra.mxu0 0.0
    %316 = vmatprep.subr.mxu0 0.0
    %317 = vmatpush1.xpose.msra.mxu0 0.0
    %318 = vmatprep.subr.mxu0 0.0
    %319 = vmatpush1.xpose.msra.mxu0 0.0
    %320 = vmatprep.subr.mxu0 0.0
    %321 = vmatpush1.xpose.msra.mxu0 0.0
    %322 = vmatprep.subr.mxu0 0.0
    %323 = vmatpush1.xpose.msra.mxu0 0.0
    %324 = vmatprep.subr.mxu0 0.0
    %325 = vmatpush1.xpose.msra.mxu0 0.0
    %326 = vmatprep.subr.mxu0 0.0
    %327 = vmatpush1.xpose.msra.mxu0 0.0
    %328 = vmatprep.mubr.f32.mxu0 0.0
    %329 = vmatmul.mubr.f32.gmra.mrb[0].mxu0 %v259
    %v330 = vpop.f32.mrb[0].mxu0
    %v331 = vadd.f32 0.0, %v330
    %v332 = vpop.f32.mrb[0].mxu0
    %333 = vdwg.mxu0
    %v335 = vsel %vm105, %v84, 0
    %v338 = vsel %vm105, %v92, 0
    %340 = vmatprep.subr.mxu0 0.0
    %341 = vmatpush1.xpose.msra.mxu0 %v338
    %342 = vmatprep.subr.mxu0 0.0
    %343 = vmatpush1.xpose.msra.mxu0 0.0
    %344 = vmatprep.subr.mxu0 0.0
    %345 = vmatpush1.xpose.msra.mxu0 0.0
    %346 = vmatprep.subr.mxu0 0.0
    %347 = vmatpush1.xpose.msra.mxu0 0.0
    %348 = vmatprep.subr.mxu0 0.0
    %349 = vmatpush1.xpose.msra.mxu0 0.0
    %350 = vmatprep.subr.mxu0 0.0
    %351 = vmatpush1.xpose.msra.mxu0 0.0
    %352 = vmatprep.subr.mxu0 0.0
    %353 = vmatpush1.xpose.msra.mxu0 0.0
    %354 = vmatprep.subr.mxu0 0.0
    %355 = vmatpush1.xpose.msra.mxu0 0.0
    %356 = vmatprep.subr.mxu0 0.0
    %357 = vmatpush1.xpose.msra.mxu0 0.0
    %358 = vmatprep.subr.mxu0 0.0
    %359 = vmatpush1.xpose.msra.mxu0 0.0
    %360 = vmatprep.subr.mxu0 0.0
    %361 = vmatpush1.xpose.msra.mxu0 0.0
    %362 = vmatprep.subr.mxu0 0.0
    %363 = vmatpush1.xpose.msra.mxu0 0.0
    %364 = vmatprep.subr.mxu0 0.0
    %365 = vmatpush1.xpose.msra.mxu0 0.0
    %366 = vmatprep.subr.mxu0 0.0
    %367 = vmatpush1.xpose.msra.mxu0 0.0
    %368 = vmatprep.subr.mxu0 0.0
    %369 = vmatpush1.xpose.msra.mxu0 0.0
    %370 = vmatprep.subr.mxu0 0.0
    %371 = vmatpush1.xpose.msra.mxu0 0.0
    %372 = vmatprep.subr.mxu0 0.0
    %373 = vmatpush1.xpose.msra.mxu0 0.0
    %374 = vmatprep.subr.mxu0 0.0
    %375 = vmatpush1.xpose.msra.mxu0 0.0
    %376 = vmatprep.subr.mxu0 0.0
    %377 = vmatpush1.xpose.msra.mxu0 0.0
    %378 = vmatprep.subr.mxu0 0.0
    %379 = vmatpush1.xpose.msra.mxu0 0.0
    %380 = vmatprep.subr.mxu0 0.0
    %381 = vmatpush1.xpose.msra.mxu0 0.0
    %382 = vmatprep.subr.mxu0 0.0
    %383 = vmatpush1.xpose.msra.mxu0 0.0
    %384 = vmatprep.subr.mxu0 0.0
    %385 = vmatpush1.xpose.msra.mxu0 0.0
    %386 = vmatprep.subr.mxu0 0.0
    %387 = vmatpush1.xpose.msra.mxu0 0.0
    %388 = vmatprep.subr.mxu0 0.0
    %389 = vmatpush1.xpose.msra.mxu0 0.0
    %390 = vmatprep.subr.mxu0 0.0
    %391 = vmatpush1.xpose.msra.mxu0 0.0
    %392 = vmatprep.subr.mxu0 0.0
    %393 = vmatpush1.xpose.msra.mxu0 0.0
    %394 = vmatprep.subr.mxu0 0.0
    %395 = vmatpush1.xpose.msra.mxu0 0.0
    %396 = vmatprep.subr.mxu0 0.0
    %397 = vmatpush1.xpose.msra.mxu0 0.0
    %398 = vmatprep.subr.mxu0 0.0
    %399 = vmatpush1.xpose.msra.mxu0 0.0
    %400 = vmatprep.subr.mxu0 0.0
    %401 = vmatpush1.xpose.msra.mxu0 0.0
    %402 = vmatprep.subr.mxu0 0.0
    %403 = vmatpush1.xpose.msra.mxu0 0.0
    %404 = vmatprep.mubr.f32.mxu0 0.0
    %405 = vmatmul.mubr.f32.gmra.mrb[0].mxu0 %v335
    %v406 = vpop.f32.mrb[0].mxu0
    %v407 = vadd.f32 0.0, %v406
    %v408 = vpop.f32.mrb[0].mxu0
    %409 = vdwg.mxu0
    %v411 = vsel %vm105, %v85, 0
    %v414 = vsel %vm105, %v93, 0
    %416 = vmatprep.subr.mxu0 0.0
    %417 = vmatpush1.xpose.msra.mxu0 %v414
    %418 = vmatprep.subr.mxu0 0.0
    %419 = vmatpush1.xpose.msra.mxu0 0.0
    %420 = vmatprep.subr.mxu0 0.0
    %421 = vmatpush1.xpose.msra.mxu0 0.0
    %422 = vmatprep.subr.mxu0 0.0
    %423 = vmatpush1.xpose.msra.mxu0 0.0
    %424 = vmatprep.subr.mxu0 0.0
    %425 = vmatpush1.xpose.msra.mxu0 0.0
    %426 = vmatprep.subr.mxu0 0.0
    %427 = vmatpush1.xpose.msra.mxu0 0.0
    %428 = vmatprep.subr.mxu0 0.0
    %429 = vmatpush1.xpose.msra.mxu0 0.0
    %430 = vmatprep.subr.mxu0 0.0
    %431 = vmatpush1.xpose.msra.mxu0 0.0
    %432 = vmatprep.subr.mxu0 0.0
    %433 = vmatpush1.xpose.msra.mxu0 0.0
    %434 = vmatprep.subr.mxu0 0.0
    %435 = vmatpush1.xpose.msra.mxu0 0.0
    %436 = vmatprep.subr.mxu0 0.0
    %437 = vmatpush1.xpose.msra.mxu0 0.0
    %438 = vmatprep.subr.mxu0 0.0
    %439 = vmatpush1.xpose.msra.mxu0 0.0
    %440 = vmatprep.subr.mxu0 0.0
    %441 = vmatpush1.xpose.msra.mxu0 0.0
    %442 = vmatprep.subr.mxu0 0.0
    %443 = vmatpush1.xpose.msra.mxu0 0.0
    %444 = vmatprep.subr.mxu0 0.0
    %445 = vmatpush1.xpose.msra.mxu0 0.0
    %446 = vmatprep.subr.mxu0 0.0
    %447 = vmatpush1.xpose.msra.mxu0 0.0
    %448 = vmatprep.subr.mxu0 0.0
    %449 = vmatpush1.xpose.msra.mxu0 0.0
    %450 = vmatprep.subr.mxu0 0.0
    %451 = vmatpush1.xpose.msra.mxu0 0.0
    %452 = vmatprep.subr.mxu0 0.0
    %453 = vmatpush1.xpose.msra.mxu0 0.0
    %454 = vmatprep.subr.mxu0 0.0
    %455 = vmatpush1.xpose.msra.mxu0 0.0
    %456 = vmatprep.subr.mxu0 0.0
    %457 = vmatpush1.xpose.msra.mxu0 0.0
    %458 = vmatprep.subr.mxu0 0.0
    %459 = vmatpush1.xpose.msra.mxu0 0.0
    %460 = vmatprep.subr.mxu0 0.0
    %461 = vmatpush1.xpose.msra.mxu0 0.0
    %462 = vmatprep.subr.mxu0 0.0
    %463 = vmatpush1.xpose.msra.mxu0 0.0
    %464 = vmatprep.subr.mxu0 0.0
    %465 = vmatpush1.xpose.msra.mxu0 0.0
    %466 = vmatprep.subr.mxu0 0.0
    %467 = vmatpush1.xpose.msra.mxu0 0.0
    %468 = vmatprep.subr.mxu0 0.0
    %469 = vmatpush1.xpose.msra.mxu0 0.0
    %470 = vmatprep.subr.mxu0 0.0
    %471 = vmatpush1.xpose.msra.mxu0 0.0
    %472 = vmatprep.subr.mxu0 0.0
    %473 = vmatpush1.xpose.msra.mxu0 0.0
    %474 = vmatprep.subr.mxu0 0.0
    %475 = vmatpush1.xpose.msra.mxu0 0.0
    %476 = vmatprep.subr.mxu0 0.0
    %477 = vmatpush1.xpose.msra.mxu0 0.0
    %478 = vmatprep.subr.mxu0 0.0
    %479 = vmatpush1.xpose.msra.mxu0 0.0
    %480 = vmatprep.mubr.f32.mxu0 0.0
    %481 = vmatmul.mubr.f32.gmra.mrb[0].mxu0 %v411
    %v482 = vpop.f32.mrb[0].mxu0
    %v483 = vadd.f32 0.0, %v482
    %v484 = vpop.f32.mrb[0].mxu0
    %485 = vdwg.mxu0
    %v487 = vsel %vm105, %v86, 0
    %v490 = vsel %vm105, %v94, 0
    %492 = vmatprep.subr.mxu0 0.0
    %493 = vmatpush1.xpose.msra.mxu0 %v490
    %494 = vmatprep.subr.mxu0 0.0
    %495 = vmatpush1.xpose.msra.mxu0 0.0
    %496 = vmatprep.subr.mxu0 0.0
    %497 = vmatpush1.xpose.msra.mxu0 0.0
    %498 = vmatprep.subr.mxu0 0.0
    %499 = vmatpush1.xpose.msra.mxu0 0.0
    %500 = vmatprep.subr.mxu0 0.0
    %501 = vmatpush1.xpose.msra.mxu0 0.0
    %502 = vmatprep.subr.mxu0 0.0
    %503 = vmatpush1.xpose.msra.mxu0 0.0
    %504 = vmatprep.subr.mxu0 0.0
    %505 = vmatpush1.xpose.msra.mxu0 0.0
    %506 = vmatprep.subr.mxu0 0.0
    %507 = vmatpush1.xpose.msra.mxu0 0.0
    %508 = vmatprep.subr.mxu0 0.0
    %509 = vmatpush1.xpose.msra.mxu0 0.0
    %510 = vmatprep.subr.mxu0 0.0
    %511 = vmatpush1.xpose.msra.mxu0 0.0
    %512 = vmatprep.subr.mxu0 0.0
    %513 = vmatpush1.xpose.msra.mxu0 0.0
    %514 = vmatprep.subr.mxu0 0.0
    %515 = vmatpush1.xpose.msra.mxu0 0.0
    %516 = vmatprep.subr.mxu0 0.0
    %517 = vmatpush1.xpose.msra.mxu0 0.0
    %518 = vmatprep.subr.mxu0 0.0
    %519 = vmatpush1.xpose.msra.mxu0 0.0
    %520 = vmatprep.subr.mxu0 0.0
    %521 = vmatpush1.xpose.msra.mxu0 0.0
    %522 = vmatprep.subr.mxu0 0.0
    %523 = vmatpush1.xpose.msra.mxu0 0.0
    %524 = vmatprep.subr.mxu0 0.0
    %525 = vmatpush1.xpose.msra.mxu0 0.0
    %526 = vmatprep.subr.mxu0 0.0
    %527 = vmatpush1.xpose.msra.mxu0 0.0
    %528 = vmatprep.subr.mxu0 0.0
    %529 = vmatpush1.xpose.msra.mxu0 0.0
    %530 = vmatprep.subr.mxu0 0.0
    %531 = vmatpush1.xpose.msra.mxu0 0.0
    %532 = vmatprep.subr.mxu0 0.0
    %533 = vmatpush1.xpose.msra.mxu0 0.0
    %534 = vmatprep.subr.mxu0 0.0
    %535 = vmatpush1.xpose.msra.mxu0 0.0
    %536 = vmatprep.subr.mxu0 0.0
    %537 = vmatpush1.xpose.msra.mxu0 0.0
    %538 = vmatprep.subr.mxu0 0.0
    %539 = vmatpush1.xpose.msra.mxu0 0.0
    %540 = vmatprep.subr.mxu0 0.0
    %541 = vmatpush1.xpose.msra.mxu0 0.0
    %542 = vmatprep.subr.mxu0 0.0
    %543 = vmatpush1.xpose.msra.mxu0 0.0
    %544 = vmatprep.subr.mxu0 0.0
    %545 = vmatpush1.xpose.msra.mxu0 0.0
    %546 = vmatprep.subr.mxu0 0.0
    %547 = vmatpush1.xpose.msra.mxu0 0.0
    %548 = vmatprep.subr.mxu0 0.0
    %549 = vmatpush1.xpose.msra.mxu0 0.0
    %550 = vmatprep.subr.mxu0 0.0
    %551 = vmatpush1.xpose.msra.mxu0 0.0
    %552 = vmatprep.subr.mxu0 0.0
    %553 = vmatpush1.xpose.msra.mxu0 0.0
    %554 = vmatprep.subr.mxu0 0.0
    %555 = vmatpush1.xpose.msra.mxu0 0.0
    %556 = vmatprep.mubr.f32.mxu0 0.0
    %557 = vmatmul.mubr.f32.gmra.mrb[0].mxu0 %v487
    %v558 = vpop.f32.mrb[0].mxu0
    %v559 = vadd.f32 0.0, %v558
    %v560 = vpop.f32.mrb[0].mxu0
    %561 = vdwg.mxu0
    %v563 = vsel %vm105, %v87, 0
    %v566 = vsel %vm105, %v95, 0
    %568 = vmatprep.subr.mxu0 0.0
    %569 = vmatpush1.xpose.msra.mxu0 %v566
    %570 = vmatprep.subr.mxu0 0.0
    %571 = vmatpush1.xpose.msra.mxu0 0.0
    %572 = vmatprep.subr.mxu0 0.0
    %573 = vmatpush1.xpose.msra.mxu0 0.0
    %574 = vmatprep.subr.mxu0 0.0
    %575 = vmatpush1.xpose.msra.mxu0 0.0
    %576 = vmatprep.subr.mxu0 0.0
    %577 = vmatpush1.xpose.msra.mxu0 0.0
    %578 = vmatprep.subr.mxu0 0.0
    %579 = vmatpush1.xpose.msra.mxu0 0.0
    %580 = vmatprep.subr.mxu0 0.0
    %581 = vmatpush1.xpose.msra.mxu0 0.0
    %582 = vmatprep.subr.mxu0 0.0
    %583 = vmatpush1.xpose.msra.mxu0 0.0
    %584 = vmatprep.subr.mxu0 0.0
    %585 = vmatpush1.xpose.msra.mxu0 0.0
    %586 = vmatprep.subr.mxu0 0.0
    %587 = vmatpush1.xpose.msra.mxu0 0.0
    %588 = vmatprep.subr.mxu0 0.0
    %589 = vmatpush1.xpose.msra.mxu0 0.0
    %590 = vmatprep.subr.mxu0 0.0
    %591 = vmatpush1.xpose.msra.mxu0 0.0
    %592 = vmatprep.subr.mxu0 0.0
    %593 = vmatpush1.xpose.msra.mxu0 0.0
    %594 = vmatprep.subr.mxu0 0.0
    %595 = vmatpush1.xpose.msra.mxu0 0.0
    %596 = vmatprep.subr.mxu0 0.0
    %597 = vmatpush1.xpose.msra.mxu0 0.0
    %598 = vmatprep.subr.mxu0 0.0
    %599 = vmatpush1.xpose.msra.mxu0 0.0
    %600 = vmatprep.subr.mxu0 0.0
    %601 = vmatpush1.xpose.msra.mxu0 0.0
    %602 = vmatprep.subr.mxu0 0.0
    %603 = vmatpush1.xpose.msra.mxu0 0.0
    %604 = vmatprep.subr.mxu0 0.0
    %605 = vmatpush1.xpose.msra.mxu0 0.0
    %606 = vmatprep.subr.mxu0 0.0
    %607 = vmatpush1.xpose.msra.mxu0 0.0
    %608 = vmatprep.subr.mxu0 0.0
    %609 = vmatpush1.xpose.msra.mxu0 0.0
    %610 = vmatprep.subr.mxu0 0.0
    %611 = vmatpush1.xpose.msra.mxu0 0.0
    %612 = vmatprep.subr.mxu0 0.0
    %613 = vmatpush1.xpose.msra.mxu0 0.0
    %614 = vmatprep.subr.mxu0 0.0
    %615 = vmatpush1.xpose.msra.mxu0 0.0
    %616 = vmatprep.subr.mxu0 0.0
    %617 = vmatpush1.xpose.msra.mxu0 0.0
    %618 = vmatprep.subr.mxu0 0.0
    %619 = vmatpush1.xpose.msra.mxu0 0.0
    %620 = vmatprep.subr.mxu0 0.0
    %621 = vmatpush1.xpose.msra.mxu0 0.0
    %622 = vmatprep.subr.mxu0 0.0
    %623 = vmatpush1.xpose.msra.mxu0 0.0
    %624 = vmatprep.subr.mxu0 0.0
    %625 = vmatpush1.xpose.msra.mxu0 0.0
    %626 = vmatprep.subr.mxu0 0.0
    %627 = vmatpush1.xpose.msra.mxu0 0.0
    %628 = vmatprep.subr.mxu0 0.0
    %629 = vmatpush1.xpose.msra.mxu0 0.0
    %630 = vmatprep.subr.mxu0 0.0
    %631 = vmatpush1.xpose.msra.mxu0 0.0
    %632 = vmatprep.mubr.f32.mxu0 0.0
    %633 = vmatmul.mubr.f32.gmra.mrb[0].mxu0 %v563
    %v634 = vpop.f32.mrb[0].mxu0
    %v635 = vadd.f32 0.0, %v634
    %v636 = vpop.f32.mrb[0].mxu0
    %637 = vdwg.mxu0
    %v639 = vsel %vm105, %v88, 0
    %v642 = vsel %vm105, %v96, 0
    %644 = vmatprep.subr.mxu0 0.0
    %645 = vmatpush1.xpose.msra.mxu0 %v642
    %646 = vmatprep.subr.mxu0 0.0
    %647 = vmatpush1.xpose.msra.mxu0 0.0
    %648 = vmatprep.subr.mxu0 0.0
    %649 = vmatpush1.xpose.msra.mxu0 0.0
    %650 = vmatprep.subr.mxu0 0.0
    %651 = vmatpush1.xpose.msra.mxu0 0.0
    %652 = vmatprep.subr.mxu0 0.0
    %653 = vmatpush1.xpose.msra.mxu0 0.0
    %654 = vmatprep.subr.mxu0 0.0
    %655 = vmatpush1.xpose.msra.mxu0 0.0
    %656 = vmatprep.subr.mxu0 0.0
    %657 = vmatpush1.xpose.msra.mxu0 0.0
    %658 = vmatprep.subr.mxu0 0.0
    %659 = vmatpush1.xpose.msra.mxu0 0.0
    %660 = vmatprep.subr.mxu0 0.0
    %661 = vmatpush1.xpose.msra.mxu0 0.0
    %662 = vmatprep.subr.mxu0 0.0
    %663 = vmatpush1.xpose.msra.mxu0 0.0
    %664 = vmatprep.subr.mxu0 0.0
    %665 = vmatpush1.xpose.msra.mxu0 0.0
    %666 = vmatprep.subr.mxu0 0.0
    %667 = vmatpush1.xpose.msra.mxu0 0.0
    %668 = vmatprep.subr.mxu0 0.0
    %669 = vmatpush1.xpose.msra.mxu0 0.0
    %670 = vmatprep.subr.mxu0 0.0
    %671 = vmatpush1.xpose.msra.mxu0 0.0
    %672 = vmatprep.subr.mxu0 0.0
    %673 = vmatpush1.xpose.msra.mxu0 0.0
    %674 = vmatprep.subr.mxu0 0.0
    %675 = vmatpush1.xpose.msra.mxu0 0.0
    %676 = vmatprep.subr.mxu0 0.0
    %677 = vmatpush1.xpose.msra.mxu0 0.0
    %678 = vmatprep.subr.mxu0 0.0
    %679 = vmatpush1.xpose.msra.mxu0 0.0
    %680 = vmatprep.subr.mxu0 0.0
    %681 = vmatpush1.xpose.msra.mxu0 0.0
    %682 = vmatprep.subr.mxu0 0.0
    %683 = vmatpush1.xpose.msra.mxu0 0.0
    %684 = vmatprep.subr.mxu0 0.0
    %685 = vmatpush1.xpose.msra.mxu0 0.0
    %686 = vmatprep.subr.mxu0 0.0
    %687 = vmatpush1.xpose.msra.mxu0 0.0
    %688 = vmatprep.subr.mxu0 0.0
    %689 = vmatpush1.xpose.msra.mxu0 0.0
    %690 = vmatprep.subr.mxu0 0.0
    %691 = vmatpush1.xpose.msra.mxu0 0.0
    %692 = vmatprep.subr.mxu0 0.0
    %693 = vmatpush1.xpose.msra.mxu0 0.0
    %694 = vmatprep.subr.mxu0 0.0
    %695 = vmatpush1.xpose.msra.mxu0 0.0
    %696 = vmatprep.subr.mxu0 0.0
    %697 = vmatpush1.xpose.msra.mxu0 0.0
    %698 = vmatprep.subr.mxu0 0.0
    %699 = vmatpush1.xpose.msra.mxu0 0.0
    %700 = vmatprep.subr.mxu0 0.0
    %701 = vmatpush1.xpose.msra.mxu0 0.0
    %702 = vmatprep.subr.mxu0 0.0
    %703 = vmatpush1.xpose.msra.mxu0 0.0
    %704 = vmatprep.subr.mxu0 0.0
    %705 = vmatpush1.xpose.msra.mxu0 0.0
    %706 = vmatprep.subr.mxu0 0.0
    %707 = vmatpush1.xpose.msra.mxu0 0.0
    %708 = vmatprep.mubr.f32.mxu0 0.0
    %709 = vmatmul.mubr.f32.gmra.mrb[0].mxu0 %v639
    %v710 = vpop.f32.mrb[0].mxu0
    %v711 = vadd.f32 0.0, %v710
    %v712 = vpop.f32.mrb[0].mxu0
    %713 = vdwg.mxu0
    %vm714 = vcmask 64512
    %v715 = vsel %vm714, %v179, -inf
    %716 = vmax.xlane.f32.xlu0 %v715
    %v717 = vpop.xlane.xlu0 %716
    %v718 = vsel %vm714, %v255, -inf
    %719 = vmax.xlane.f32.xlu0 %v718
    %v720 = vpop.xlane.xlu0 %719
    %v721 = vsel %vm714, %v331, -inf
    %722 = vmax.xlane.f32.xlu0 %v721
    %v723 = vpop.xlane.xlu0 %722
    %v724 = vsel %vm714, %v407, -inf
    %725 = vmax.xlane.f32.xlu0 %v724
    %v726 = vpop.xlane.xlu0 %725
    %v727 = vsel %vm714, %v483, -inf
    %728 = vmax.xlane.f32.xlu0 %v727
    %v729 = vpop.xlane.xlu0 %728
    %v730 = vsel %vm714, %v559, -inf
    %731 = vmax.xlane.f32.xlu0 %v730
    %v732 = vpop.xlane.xlu0 %731
    %v733 = vsel %vm714, %v635, -inf
    %734 = vmax.xlane.f32.xlu0 %v733
    %v735 = vpop.xlane.xlu0 %734
    %v736 = vsel %vm714, %v711, -inf
    %737 = vmax.xlane.f32.xlu0 %v736
    %v738 = vpop.xlane.xlu0 %737
    %v739 = vsub.f32 %v179, %v717
    %v740 = vsub.f32 %v255, %v720
    %v741 = vsub.f32 %v331, %v723
    %v742 = vsub.f32 %v407, %v726
    %v743 = vsub.f32 %v483, %v729
    %v744 = vsub.f32 %v559, %v732
    %v745 = vsub.f32 %v635, %v735
    %v746 = vsub.f32 %v711, %v738
    %v747 = vmul.f32 %v739, 1.442695
    %v748 = vpow.pop %v747
    %v749 = vmul.f32 %v740, 1.442695
    %v750 = vpow.pop %v749
    %v751 = vmul.f32 %v741, 1.442695
    %v752 = vpow.pop %v751
    %v753 = vmul.f32 %v742, 1.442695
    %v754 = vpow.pop %v753
    %v755 = vmul.f32 %v743, 1.442695
    %v756 = vpow.pop %v755
    %v757 = vmul.f32 %v744, 1.442695
    %v758 = vpow.pop %v757
    %v759 = vmul.f32 %v745, 1.442695
    %v760 = vpow.pop %v759
    %v761 = vmul.f32 %v746, 1.442695
    %v762 = vpow.pop %v761
    %v763 = vsel %vm714, %v748, 0.0
    %764 = vadd.xlane.f32.xlu0 %v763
    %v765 = vpop.xlane.xlu0 %764
    %v766 = vsel %vm714, %v750, 0.0
    %767 = vadd.xlane.f32.xlu0 %v766
    %v768 = vpop.xlane.xlu0 %767
    %v769 = vsel %vm714, %v752, 0.0
    %770 = vadd.xlane.f32.xlu0 %v769
    %v771 = vpop.xlane.xlu0 %770
    %v772 = vsel %vm714, %v754, 0.0
    %773 = vadd.xlane.f32.xlu0 %v772
    %v774 = vpop.xlane.xlu0 %773
    %v775 = vsel %vm714, %v756, 0.0
    %776 = vadd.xlane.f32.xlu0 %v775
    %v777 = vpop.xlane.xlu0 %776
    %v778 = vsel %vm714, %v758, 0.0
    %779 = vadd.xlane.f32.xlu0 %v778
    %v780 = vpop.xlane.xlu0 %779
    %v781 = vsel %vm714, %v760, 0.0
    %782 = vadd.xlane.f32.xlu0 %v781
    %v783 = vpop.xlane.xlu0 %782
    %v784 = vsel %vm714, %v762, 0.0
    %785 = vadd.xlane.f32.xlu0 %v784
    %v786 = vpop.xlane.xlu0 %785
    %v787 = vld [vmem:[#allocation2] sm:$0xff]
    %v788 = vld [vmem:[#allocation2 + $0x8] sm:$0xff]
    %v789 = vld [vmem:[#allocation2 + $0x10] sm:$0xff]
    %v790 = vld [vmem:[#allocation2 + $0x18] sm:$0xff]
    %v791 = vld [vmem:[#allocation2 + $0x20] sm:$0xff]
    %v792 = vld [vmem:[#allocation2 + $0x28] sm:$0xff]
    %v793 = vld [vmem:[#allocation2 + $0x30] sm:$0xff]
    %v794 = vld [vmem:[#allocation2 + $0x38] sm:$0xff]
    %v795 = vmul.f32 %v748, %v787
    %v796 = vmul.f32 %v750, %v788
    %v797 = vmul.f32 %v752, %v789
    %v798 = vmul.f32 %v754, %v790
    %v799 = vmul.f32 %v756, %v791
    %v800 = vmul.f32 %v758, %v792
    %v801 = vmul.f32 %v760, %v793
    %v802 = vmul.f32 %v762, %v794
    %v804 = vsel %vm714, %v795, 0
    %806 = vmatprep.subr.mxu0 0.0
    %807 = vmatpush1.msra.mxu0 %v97
    %808 = vmatprep.subr.mxu0 0.0
    %809 = vmatpush1.msra.mxu0 0.0
    %810 = vmatprep.subr.mxu0 0.0
    %811 = vmatpush1.msra.mxu0 0.0
    %812 = vmatprep.subr.mxu0 0.0
    %813 = vmatpush1.msra.mxu0 0.0
    %814 = vmatprep.subr.mxu0 0.0
    %815 = vmatpush1.msra.mxu0 0.0
    %816 = vmatprep.subr.mxu0 0.0
    %817 = vmatpush1.msra.mxu0 0.0
    %818 = vmatprep.subr.mxu0 0.0
    %819 = vmatpush1.msra.mxu0 0.0
    %820 = vmatprep.subr.mxu0 0.0
    %821 = vmatpush1.msra.mxu0 0.0
    %822 = vmatprep.subr.mxu0 0.0
    %823 = vmatpush1.msra.mxu0 0.0
    %824 = vmatprep.subr.mxu0 0.0
    %825 = vmatpush1.msra.mxu0 0.0
    %826 = vmatprep.subr.mxu0 0.0
    %827 = vmatpush1.msra.mxu0 0.0
    %828 = vmatprep.subr.mxu0 0.0
    %829 = vmatpush1.msra.mxu0 0.0
    %830 = vmatprep.subr.mxu0 0.0
    %831 = vmatpush1.msra.mxu0 0.0
    %832 = vmatprep.subr.mxu0 0.0
    %833 = vmatpush1.msra.mxu0 0.0
    %834 = vmatprep.subr.mxu0 0.0
    %835 = vmatpush1.msra.mxu0 0.0
    %836 = vmatprep.subr.mxu0 0.0
    %837 = vmatpush1.msra.mxu0 0.0
    %838 = vmatprep.subr.mxu0 0.0
    %839 = vmatpush1.msra.mxu0 0.0
    %840 = vmatprep.subr.mxu0 0.0
    %841 = vmatpush1.msra.mxu0 0.0
    %842 = vmatprep.subr.mxu0 0.0
    %843 = vmatpush1.msra.mxu0 0.0
    %844 = vmatprep.subr.mxu0 0.0
    %845 = vmatpush1.msra.mxu0 0.0
    %846 = vmatprep.subr.mxu0 0.0
    %847 = vmatpush1.msra.mxu0 0.0
    %848 = vmatprep.subr.mxu0 0.0
    %849 = vmatpush1.msra.mxu0 0.0
    %850 = vmatprep.subr.mxu0 0.0
    %851 = vmatpush1.msra.mxu0 0.0
    %852 = vmatprep.subr.mxu0 0.0
    %853 = vmatpush1.msra.mxu0 0.0
    %854 = vmatprep.subr.mxu0 0.0
    %855 = vmatpush1.msra.mxu0 0.0
    %856 = vmatprep.subr.mxu0 0.0
    %857 = vmatpush1.msra.mxu0 0.0
    %858 = vmatprep.subr.mxu0 0.0
    %859 = vmatpush1.msra.mxu0 0.0
    %860 = vmatprep.subr.mxu0 0.0
    %861 = vmatpush1.msra.mxu0 0.0
    %862 = vmatprep.subr.mxu0 0.0
    %863 = vmatpush1.msra.mxu0 0.0
    %864 = vmatprep.subr.mxu0 0.0
    %865 = vmatpush1.msra.mxu0 0.0
    %866 = vmatprep.subr.mxu0 0.0
    %867 = vmatpush1.msra.mxu0 0.0
    %868 = vmatprep.subr.mxu0 0.0
    %869 = vmatpush1.msra.mxu0 0.0
    %870 = vmatprep.mubr.f32.mxu0 0.0
    %871 = vmatmul.mubr.f32.gmra.mrb[0].mxu0 %v804
    %v872 = vpop.f32.mrb[0].mxu0
    %v873 = vadd.f32 0.0, %v872
    %v874 = vpop.f32.mrb[0].mxu0
    %875 = vdwg.mxu0
    %v877 = vsel %vm714, %v796, 0
    %879 = vmatprep.subr.mxu0 0.0
    %880 = vmatpush1.msra.mxu0 %v98
    %881 = vmatprep.subr.mxu0 0.0
    %882 = vmatpush1.msra.mxu0 0.0
    %883 = vmatprep.subr.mxu0 0.0
    %884 = vmatpush1.msra.mxu0 0.0
    %885 = vmatprep.subr.mxu0 0.0
    %886 = vmatpush1.msra.mxu0 0.0
    %887 = vmatprep.subr.mxu0 0.0
    %888 = vmatpush1.msra.mxu0 0.0
    %889 = vmatprep.subr.mxu0 0.0
    %890 = vmatpush1.msra.mxu0 0.0
    %891 = vmatprep.subr.mxu0 0.0
    %892 = vmatpush1.msra.mxu0 0.0
    %893 = vmatprep.subr.mxu0 0.0
    %894 = vmatpush1.msra.mxu0 0.0
    %895 = vmatprep.subr.mxu0 0.0
    %896 = vmatpush1.msra.mxu0 0.0
    %897 = vmatprep.subr.mxu0 0.0
    %898 = vmatpush1.msra.mxu0 0.0
    %899 = vmatprep.subr.mxu0 0.0
    %900 = vmatpush1.msra.mxu0 0.0
    %901 = vmatprep.subr.mxu0 0.0
    %902 = vmatpush1.msra.mxu0 0.0
    %903 = vmatprep.subr.mxu0 0.0
    %904 = vmatpush1.msra.mxu0 0.0
    %905 = vmatprep.subr.mxu0 0.0
    %906 = vmatpush1.msra.mxu0 0.0
    %907 = vmatprep.subr.mxu0 0.0
    %908 = vmatpush1.msra.mxu0 0.0
    %909 = vmatprep.subr.mxu0 0.0
    %910 = vmatpush1.msra.mxu0 0.0
    %911 = vmatprep.subr.mxu0 0.0
    %912 = vmatpush1.msra.mxu0 0.0
    %913 = vmatprep.subr.mxu0 0.0
    %914 = vmatpush1.msra.mxu0 0.0
    %915 = vmatprep.subr.mxu0 0.0
    %916 = vmatpush1.msra.mxu0 0.0
    %917 = vmatprep.subr.mxu0 0.0
    %918 = vmatpush1.msra.mxu0 0.0
    %919 = vmatprep.subr.mxu0 0.0
    %920 = vmatpush1.msra.mxu0 0.0
    %921 = vmatprep.subr.mxu0 0.0
    %922 = vmatpush1.msra.mxu0 0.0
    %923 = vmatprep.subr.mxu0 0.0
    %924 = vmatpush1.msra.mxu0 0.0
    %925 = vmatprep.subr.mxu0 0.0
    %926 = vmatpush1.msra.mxu0 0.0
    %927 = vmatprep.subr.mxu0 0.0
    %928 = vmatpush1.msra.mxu0 0.0
    %929 = vmatprep.subr.mxu0 0.0
    %930 = vmatpush1.msra.mxu0 0.0
    %931 = vmatprep.subr.mxu0 0.0
    %932 = vmatpush1.msra.mxu0 0.0
    %933 = vmatprep.subr.mxu0 0.0
    %934 = vmatpush1.msra.mxu0 0.0
    %935 = vmatprep.subr.mxu0 0.0
    %936 = vmatpush1.msra.mxu0 0.0
    %937 = vmatprep.subr.mxu0 0.0
    %938 = vmatpush1.msra.mxu0 0.0
    %939 = vmatprep.subr.mxu0 0.0
    %940 = vmatpush1.msra.mxu0 0.0
    %941 = vmatprep.subr.mxu0 0.0
    %942 = vmatpush1.msra.mxu0 0.0
    %943 = vmatprep.mubr.f32.mxu0 0.0
    %944 = vmatmul.mubr.f32.gmra.mrb[0].mxu0 %v877
    %v945 = vpop.f32.mrb[0].mxu0
    %v946 = vadd.f32 0.0, %v945
    %v947 = vpop.f32.mrb[0].mxu0
    %948 = vdwg.mxu0
    %v950 = vsel %vm714, %v797, 0
    %952 = vmatprep.subr.mxu0 0.0
    %953 = vmatpush1.msra.mxu0 %v99
    %954 = vmatprep.subr.mxu0 0.0
    %955 = vmatpush1.msra.mxu0 0.0
    %956 = vmatprep.subr.mxu0 0.0
    %957 = vmatpush1.msra.mxu0 0.0
    %958 = vmatprep.subr.mxu0 0.0
    %959 = vmatpush1.msra.mxu0 0.0
    %960 = vmatprep.subr.mxu0 0.0
    %961 = vmatpush1.msra.mxu0 0.0
    %962 = vmatprep.subr.mxu0 0.0
    %963 = vmatpush1.msra.mxu0 0.0
    %964 = vmatprep.subr.mxu0 0.0
    %965 = vmatpush1.msra.mxu0 0.0
    %966 = vmatprep.subr.mxu0 0.0
    %967 = vmatpush1.msra.mxu0 0.0
    %968 = vmatprep.subr.mxu0 0.0
    %969 = vmatpush1.msra.mxu0 0.0
    %970 = vmatprep.subr.mxu0 0.0
    %971 = vmatpush1.msra.mxu0 0.0
    %972 = vmatprep.subr.mxu0 0.0
    %973 = vmatpush1.msra.mxu0 0.0
    %974 = vmatprep.subr.mxu0 0.0
    %975 = vmatpush1.msra.mxu0 0.0
    %976 = vmatprep.subr.mxu0 0.0
    %977 = vmatpush1.msra.mxu0 0.0
    %978 = vmatprep.subr.mxu0 0.0
    %979 = vmatpush1.msra.mxu0 0.0
    %980 = vmatprep.subr.mxu0 0.0
    %981 = vmatpush1.msra.mxu0 0.0
    %982 = vmatprep.subr.mxu0 0.0
    %983 = vmatpush1.msra.mxu0 0.0
    %984 = vmatprep.subr.mxu0 0.0
    %985 = vmatpush1.msra.mxu0 0.0
    %986 = vmatprep.subr.mxu0 0.0
    %987 = vmatpush1.msra.mxu0 0.0
    %988 = vmatprep.subr.mxu0 0.0
    %989 = vmatpush1.msra.mxu0 0.0
    %990 = vmatprep.subr.mxu0 0.0
    %991 = vmatpush1.msra.mxu0 0.0
    %992 = vmatprep.subr.mxu0 0.0
    %993 = vmatpush1.msra.mxu0 0.0
    %994 = vmatprep.subr.mxu0 0.0
    %995 = vmatpush1.msra.mxu0 0.0
    %996 = vmatprep.subr.mxu0 0.0
    %997 = vmatpush1.msra.mxu0 0.0
    %998 = vmatprep.subr.mxu0 0.0
    %999 = vmatpush1.msra.mxu0 0.0
    %1000 = vmatprep.subr.mxu0 0.0
    %1001 = vmatpush1.msra.mxu0 0.0
    %1002 = vmatprep.subr.mxu0 0.0
    %1003 = vmatpush1.msra.mxu0 0.0
    %1004 = vmatprep.subr.mxu0 0.0
    %1005 = vmatpush1.msra.mxu0 0.0
    %1006 = vmatprep.subr.mxu0 0.0
    %1007 = vmatpush1.msra.mxu0 0.0
    %1008 = vmatprep.subr.mxu0 0.0
    %1009 = vmatpush1.msra.mxu0 0.0
    %1010 = vmatprep.subr.mxu0 0.0
    %1011 = vmatpush1.msra.mxu0 0.0
    %1012 = vmatprep.subr.mxu0 0.0
    %1013 = vmatpush1.msra.mxu0 0.0
    %1014 = vmatprep.subr.mxu0 0.0
    %1015 = vmatpush1.msra.mxu0 0.0
    %1016 = vmatprep.mubr.f32.mxu0 0.0
    %1017 = vmatmul.mubr.f32.gmra.mrb[0].mxu0 %v950
    %v1018 = vpop.f32.mrb[0].mxu0
    %v1019 = vadd.f32 0.0, %v1018
    %v1020 = vpop.f32.mrb[0].mxu0
    %1021 = vdwg.mxu0
    %v1023 = vsel %vm714, %v798, 0
    %1025 = vmatprep.subr.mxu0 0.0
    %1026 = vmatpush1.msra.mxu0 %v100
    %1027 = vmatprep.subr.mxu0 0.0
    %1028 = vmatpush1.msra.mxu0 0.0
    %1029 = vmatprep.subr.mxu0 0.0
    %1030 = vmatpush1.msra.mxu0 0.0
    %1031 = vmatprep.subr.mxu0 0.0
    %1032 = vmatpush1.msra.mxu0 0.0
    %1033 = vmatprep.subr.mxu0 0.0
    %1034 = vmatpush1.msra.mxu0 0.0
    %1035 = vmatprep.subr.mxu0 0.0
    %1036 = vmatpush1.msra.mxu0 0.0
    %1037 = vmatprep.subr.mxu0 0.0
    %1038 = vmatpush1.msra.mxu0 0.0
    %1039 = vmatprep.subr.mxu0 0.0
    %1040 = vmatpush1.msra.mxu0 0.0
    %1041 = vmatprep.subr.mxu0 0.0
    %1042 = vmatpush1.msra.mxu0 0.0
    %1043 = vmatprep.subr.mxu0 0.0
    %1044 = vmatpush1.msra.mxu0 0.0
    %1045 = vmatprep.subr.mxu0 0.0
    %1046 = vmatpush1.msra.mxu0 0.0
    %1047 = vmatprep.subr.mxu0 0.0
    %1048 = vmatpush1.msra.mxu0 0.0
    %1049 = vmatprep.subr.mxu0 0.0
    %1050 = vmatpush1.msra.mxu0 0.0
    %1051 = vmatprep.subr.mxu0 0.0
    %1052 = vmatpush1.msra.mxu0 0.0
    %1053 = vmatprep.subr.mxu0 0.0
    %1054 = vmatpush1.msra.mxu0 0.0
    %1055 = vmatprep.subr.mxu0 0.0
    %1056 = vmatpush1.msra.mxu0 0.0
    %1057 = vmatprep.subr.mxu0 0.0
    %1058 = vmatpush1.msra.mxu0 0.0
    %1059 = vmatprep.subr.mxu0 0.0
    %1060 = vmatpush1.msra.mxu0 0.0
    %1061 = vmatprep.subr.mxu0 0.0
    %1062 = vmatpush1.msra.mxu0 0.0
    %1063 = vmatprep.subr.mxu0 0.0
    %1064 = vmatpush1.msra.mxu0 0.0
    %1065 = vmatprep.subr.mxu0 0.0
    %1066 = vmatpush1.msra.mxu0 0.0
    %1067 = vmatprep.subr.mxu0 0.0
    %1068 = vmatpush1.msra.mxu0 0.0
    %1069 = vmatprep.subr.mxu0 0.0
    %1070 = vmatpush1.msra.mxu0 0.0
    %1071 = vmatprep.subr.mxu0 0.0
    %1072 = vmatpush1.msra.mxu0 0.0
    %1073 = vmatprep.subr.mxu0 0.0
    %1074 = vmatpush1.msra.mxu0 0.0
    %1075 = vmatprep.subr.mxu0 0.0
    %1076 = vmatpush1.msra.mxu0 0.0
    %1077 = vmatprep.subr.mxu0 0.0
    %1078 = vmatpush1.msra.mxu0 0.0
    %1079 = vmatprep.subr.mxu0 0.0
    %1080 = vmatpush1.msra.mxu0 0.0
    %1081 = vmatprep.subr.mxu0 0.0
    %1082 = vmatpush1.msra.mxu0 0.0
    %1083 = vmatprep.subr.mxu0 0.0
    %1084 = vmatpush1.msra.mxu0 0.0
    %1085 = vmatprep.subr.mxu0 0.0
    %1086 = vmatpush1.msra.mxu0 0.0
    %1087 = vmatprep.subr.mxu0 0.0
    %1088 = vmatpush1.msra.mxu0 0.0
    %1089 = vmatprep.mubr.f32.mxu0 0.0
    %1090 = vmatmul.mubr.f32.gmra.mrb[0].mxu0 %v1023
    %v1091 = vpop.f32.mrb[0].mxu0
    %v1092 = vadd.f32 0.0, %v1091
    %v1093 = vpop.f32.mrb[0].mxu0
    %1094 = vdwg.mxu0
    %v1096 = vsel %vm714, %v799, 0
    %1098 = vmatprep.subr.mxu0 0.0
    %1099 = vmatpush1.msra.mxu0 %v101
    %1100 = vmatprep.subr.mxu0 0.0
    %1101 = vmatpush1.msra.mxu0 0.0
    %1102 = vmatprep.subr.mxu0 0.0
    %1103 = vmatpush1.msra.mxu0 0.0
    %1104 = vmatprep.subr.mxu0 0.0
    %1105 = vmatpush1.msra.mxu0 0.0
    %1106 = vmatprep.subr.mxu0 0.0
    %1107 = vmatpush1.msra.mxu0 0.0
    %1108 = vmatprep.subr.mxu0 0.0
    %1109 = vmatpush1.msra.mxu0 0.0
    %1110 = vmatprep.subr.mxu0 0.0
    %1111 = vmatpush1.msra.mxu0 0.0
    %1112 = vmatprep.subr.mxu0 0.0
    %1113 = vmatpush1.msra.mxu0 0.0
    %1114 = vmatprep.subr.mxu0 0.0
    %1115 = vmatpush1.msra.mxu0 0.0
    %1116 = vmatprep.subr.mxu0 0.0
    %1117 = vmatpush1.msra.mxu0 0.0
    %1118 = vmatprep.subr.mxu0 0.0
    %1119 = vmatpush1.msra.mxu0 0.0
    %1120 = vmatprep.subr.mxu0 0.0
    %1121 = vmatpush1.msra.mxu0 0.0
    %1122 = vmatprep.subr.mxu0 0.0
    %1123 = vmatpush1.msra.mxu0 0.0
    %1124 = vmatprep.subr.mxu0 0.0
    %1125 = vmatpush1.msra.mxu0 0.0
    %1126 = vmatprep.subr.mxu0 0.0
    %1127 = vmatpush1.msra.mxu0 0.0
    %1128 = vmatprep.subr.mxu0 0.0
    %1129 = vmatpush1.msra.mxu0 0.0
    %1130 = vmatprep.subr.mxu0 0.0
    %1131 = vmatpush1.msra.mxu0 0.0
    %1132 = vmatprep.subr.mxu0 0.0
    %1133 = vmatpush1.msra.mxu0 0.0
    %1134 = vmatprep.subr.mxu0 0.0
    %1135 = vmatpush1.msra.mxu0 0.0
    %1136 = vmatprep.subr.mxu0 0.0
    %1137 = vmatpush1.msra.mxu0 0.0
    %1138 = vmatprep.subr.mxu0 0.0
    %1139 = vmatpush1.msra.mxu0 0.0
    %1140 = vmatprep.subr.mxu0 0.0
    %1141 = vmatpush1.msra.mxu0 0.0
    %1142 = vmatprep.subr.mxu0 0.0
    %1143 = vmatpush1.msra.mxu0 0.0
    %1144 = vmatprep.subr.mxu0 0.0
    %1145 = vmatpush1.msra.mxu0 0.0
    %1146 = vmatprep.subr.mxu0 0.0
    %1147 = vmatpush1.msra.mxu0 0.0
    %1148 = vmatprep.subr.mxu0 0.0
    %1149 = vmatpush1.msra.mxu0 0.0
    %1150 = vmatprep.subr.mxu0 0.0
    %1151 = vmatpush1.msra.mxu0 0.0
    %1152 = vmatprep.subr.mxu0 0.0
    %1153 = vmatpush1.msra.mxu0 0.0
    %1154 = vmatprep.subr.mxu0 0.0
    %1155 = vmatpush1.msra.mxu0 0.0
    %1156 = vmatprep.subr.mxu0 0.0
    %1157 = vmatpush1.msra.mxu0 0.0
    %1158 = vmatprep.subr.mxu0 0.0
    %1159 = vmatpush1.msra.mxu0 0.0
    %1160 = vmatprep.subr.mxu0 0.0
    %1161 = vmatpush1.msra.mxu0 0.0
    %1162 = vmatprep.mubr.f32.mxu0 0.0
    %1163 = vmatmul.mubr.f32.gmra.mrb[0].mxu0 %v1096
    %v1164 = vpop.f32.mrb[0].mxu0
    %v1165 = vadd.f32 0.0, %v1164
    %v1166 = vpop.f32.mrb[0].mxu0
    %1167 = vdwg.mxu0
    %v1169 = vsel %vm714, %v800, 0
    %1171 = vmatprep.subr.mxu0 0.0
    %1172 = vmatpush1.msra.mxu0 %v102
    %1173 = vmatprep.subr.mxu0 0.0
    %1174 = vmatpush1.msra.mxu0 0.0
    %1175 = vmatprep.subr.mxu0 0.0
    %1176 = vmatpush1.msra.mxu0 0.0
    %1177 = vmatprep.subr.mxu0 0.0
    %1178 = vmatpush1.msra.mxu0 0.0
    %1179 = vmatprep.subr.mxu0 0.0
    %1180 = vmatpush1.msra.mxu0 0.0
    %1181 = vmatprep.subr.mxu0 0.0
    %1182 = vmatpush1.msra.mxu0 0.0
    %1183 = vmatprep.subr.mxu0 0.0
    %1184 = vmatpush1.msra.mxu0 0.0
    %1185 = vmatprep.subr.mxu0 0.0
    %1186 = vmatpush1.msra.mxu0 0.0
    %1187 = vmatprep.subr.mxu0 0.0
    %1188 = vmatpush1.msra.mxu0 0.0
    %1189 = vmatprep.subr.mxu0 0.0
    %1190 = vmatpush1.msra.mxu0 0.0
    %1191 = vmatprep.subr.mxu0 0.0
    %1192 = vmatpush1.msra.mxu0 0.0
    %1193 = vmatprep.subr.mxu0 0.0
    %1194 = vmatpush1.msra.mxu0 0.0
    %1195 = vmatprep.subr.mxu0 0.0
    %1196 = vmatpush1.msra.mxu0 0.0
    %1197 = vmatprep.subr.mxu0 0.0
    %1198 = vmatpush1.msra.mxu0 0.0
    %1199 = vmatprep.subr.mxu0 0.0
    %1200 = vmatpush1.msra.mxu0 0.0
    %1201 = vmatprep.subr.mxu0 0.0
    %1202 = vmatpush1.msra.mxu0 0.0
    %1203 = vmatprep.subr.mxu0 0.0
    %1204 = vmatpush1.msra.mxu0 0.0
    %1205 = vmatprep.subr.mxu0 0.0
    %1206 = vmatpush1.msra.mxu0 0.0
    %1207 = vmatprep.subr.mxu0 0.0
    %1208 = vmatpush1.msra.mxu0 0.0
    %1209 = vmatprep.subr.mxu0 0.0
    %1210 = vmatpush1.msra.mxu0 0.0
    %1211 = vmatprep.subr.mxu0 0.0
    %1212 = vmatpush1.msra.mxu0 0.0
    %1213 = vmatprep.subr.mxu0 0.0
    %1214 = vmatpush1.msra.mxu0 0.0
    %1215 = vmatprep.subr.mxu0 0.0
    %1216 = vmatpush1.msra.mxu0 0.0
    %1217 = vmatprep.subr.mxu0 0.0
    %1218 = vmatpush1.msra.mxu0 0.0
    %1219 = vmatprep.subr.mxu0 0.0
    %1220 = vmatpush1.msra.mxu0 0.0
    %1221 = vmatprep.subr.mxu0 0.0
    %1222 = vmatpush1.msra.mxu0 0.0
    %1223 = vmatprep.subr.mxu0 0.0
    %1224 = vmatpush1.msra.mxu0 0.0
    %1225 = vmatprep.subr.mxu0 0.0
    %1226 = vmatpush1.msra.mxu0 0.0
    %1227 = vmatprep.subr.mxu0 0.0
    %1228 = vmatpush1.msra.mxu0 0.0
    %1229 = vmatprep.subr.mxu0 0.0
    %1230 = vmatpush1.msra.mxu0 0.0
    %1231 = vmatprep.subr.mxu0 0.0
    %1232 = vmatpush1.msra.mxu0 0.0
    %1233 = vmatprep.subr.mxu0 0.0
    %1234 = vmatpush1.msra.mxu0 0.0
    %1235 = vmatprep.mubr.f32.mxu0 0.0
    %1236 = vmatmul.mubr.f32.gmra.mrb[0].mxu0 %v1169
    %v1237 = vpop.f32.mrb[0].mxu0
    %v1238 = vadd.f32 0.0, %v1237
    %v1239 = vpop.f32.mrb[0].mxu0
    %1240 = vdwg.mxu0
    %v1242 = vsel %vm714, %v801, 0
    %1244 = vmatprep.subr.mxu0 0.0
    %1245 = vmatpush1.msra.mxu0 %v103
    %1246 = vmatprep.subr.mxu0 0.0
    %1247 = vmatpush1.msra.mxu0 0.0
    %1248 = vmatprep.subr.mxu0 0.0
    %1249 = vmatpush1.msra.mxu0 0.0
    %1250 = vmatprep.subr.mxu0 0.0
    %1251 = vmatpush1.msra.mxu0 0.0
    %1252 = vmatprep.subr.mxu0 0.0
    %1253 = vmatpush1.msra.mxu0 0.0
    %1254 = vmatprep.subr.mxu0 0.0
    %1255 = vmatpush1.msra.mxu0 0.0
    %1256 = vmatprep.subr.mxu0 0.0
    %1257 = vmatpush1.msra.mxu0 0.0
    %1258 = vmatprep.subr.mxu0 0.0
    %1259 = vmatpush1.msra.mxu0 0.0
    %1260 = vmatprep.subr.mxu0 0.0
    %1261 = vmatpush1.msra.mxu0 0.0
    %1262 = vmatprep.subr.mxu0 0.0
    %1263 = vmatpush1.msra.mxu0 0.0
    %1264 = vmatprep.subr.mxu0 0.0
    %1265 = vmatpush1.msra.mxu0 0.0
    %1266 = vmatprep.subr.mxu0 0.0
    %1267 = vmatpush1.msra.mxu0 0.0
    %1268 = vmatprep.subr.mxu0 0.0
    %1269 = vmatpush1.msra.mxu0 0.0
    %1270 = vmatprep.subr.mxu0 0.0
    %1271 = vmatpush1.msra.mxu0 0.0
    %1272 = vmatprep.subr.mxu0 0.0
    %1273 = vmatpush1.msra.mxu0 0.0
    %1274 = vmatprep.subr.mxu0 0.0
    %1275 = vmatpush1.msra.mxu0 0.0
    %1276 = vmatprep.subr.mxu0 0.0
    %1277 = vmatpush1.msra.mxu0 0.0
    %1278 = vmatprep.subr.mxu0 0.0
    %1279 = vmatpush1.msra.mxu0 0.0
    %1280 = vmatprep.subr.mxu0 0.0
    %1281 = vmatpush1.msra.mxu0 0.0
    %1282 = vmatprep.subr.mxu0 0.0
    %1283 = vmatpush1.msra.mxu0 0.0
    %1284 = vmatprep.subr.mxu0 0.0
    %1285 = vmatpush1.msra.mxu0 0.0
    %1286 = vmatprep.subr.mxu0 0.0
    %1287 = vmatpush1.msra.mxu0 0.0
    %1288 = vmatprep.subr.mxu0 0.0
    %1289 = vmatpush1.msra.mxu0 0.0
    %1290 = vmatprep.subr.mxu0 0.0
    %1291 = vmatpush1.msra.mxu0 0.0
    %1292 = vmatprep.subr.mxu0 0.0
    %1293 = vmatpush1.msra.mxu0 0.0
    %1294 = vmatprep.subr.mxu0 0.0
    %1295 = vmatpush1.msra.mxu0 0.0
    %1296 = vmatprep.subr.mxu0 0.0
    %1297 = vmatpush1.msra.mxu0 0.0
    %1298 = vmatprep.subr.mxu0 0.0
    %1299 = vmatpush1.msra.mxu0 0.0
    %1300 = vmatprep.subr.mxu0 0.0
    %1301 = vmatpush1.msra.mxu0 0.0
    %1302 = vmatprep.subr.mxu0 0.0
    %1303 = vmatpush1.msra.mxu0 0.0
    %1304 = vmatprep.subr.mxu0 0.0
    %1305 = vmatpush1.msra.mxu0 0.0
    %1306 = vmatprep.subr.mxu0 0.0
    %1307 = vmatpush1.msra.mxu0 0.0
    %1308 = vmatprep.mubr.f32.mxu0 0.0
    %1309 = vmatmul.mubr.f32.gmra.mrb[0].mxu0 %v1242
    %v1310 = vpop.f32.mrb[0].mxu0
    %v1311 = vadd.f32 0.0, %v1310
    %v1312 = vpop.f32.mrb[0].mxu0
    %1313 = vdwg.mxu0
    %v1315 = vsel %vm714, %v802, 0
    %1317 = vmatprep.subr.mxu0 0.0
    %1318 = vmatpush1.msra.mxu0 %v104
    %1319 = vmatprep.subr.mxu0 0.0
    %1320 = vmatpush1.msra.mxu0 0.0
    %1321 = vmatprep.subr.mxu0 0.0
    %1322 = vmatpush1.msra.mxu0 0.0
    %1323 = vmatprep.subr.mxu0 0.0
    %1324 = vmatpush1.msra.mxu0 0.0
    %1325 = vmatprep.subr.mxu0 0.0
    %1326 = vmatpush1.msra.mxu0 0.0
    %1327 = vmatprep.subr.mxu0 0.0
    %1328 = vmatpush1.msra.mxu0 0.0
    %1329 = vmatprep.subr.mxu0 0.0
    %1330 = vmatpush1.msra.mxu0 0.0
    %1331 = vmatprep.subr.mxu0 0.0
    %1332 = vmatpush1.msra.mxu0 0.0
    %1333 = vmatprep.subr.mxu0 0.0
    %1334 = vmatpush1.msra.mxu0 0.0
    %1335 = vmatprep.subr.mxu0 0.0
    %1336 = vmatpush1.msra.mxu0 0.0
    %1337 = vmatprep.subr.mxu0 0.0
    %1338 = vmatpush1.msra.mxu0 0.0
    %1339 = vmatprep.subr.mxu0 0.0
    %1340 = vmatpush1.msra.mxu0 0.0
    %1341 = vmatprep.subr.mxu0 0.0
    %1342 = vmatpush1.msra.mxu0 0.0
    %1343 = vmatprep.subr.mxu0 0.0
    %1344 = vmatpush1.msra.mxu0 0.0
    %1345 = vmatprep.subr.mxu0 0.0
    %1346 = vmatpush1.msra.mxu0 0.0
    %1347 = vmatprep.subr.mxu0 0.0
    %1348 = vmatpush1.msra.mxu0 0.0
    %1349 = vmatprep.subr.mxu0 0.0
    %1350 = vmatpush1.msra.mxu0 0.0
    %1351 = vmatprep.subr.mxu0 0.0
    %1352 = vmatpush1.msra.mxu0 0.0
    %1353 = vmatprep.subr.mxu0 0.0
    %1354 = vmatpush1.msra.mxu0 0.0
    %1355 = vmatprep.subr.mxu0 0.0
    %1356 = vmatpush1.msra.mxu0 0.0
    %1357 = vmatprep.subr.mxu0 0.0
    %1358 = vmatpush1.msra.mxu0 0.0
    %1359 = vmatprep.subr.mxu0 0.0
    %1360 = vmatpush1.msra.mxu0 0.0
    %1361 = vmatprep.subr.mxu0 0.0
    %1362 = vmatpush1.msra.mxu0 0.0
    %1363 = vmatprep.subr.mxu0 0.0
    %1364 = vmatpush1.msra.mxu0 0.0
    %1365 = vmatprep.subr.mxu0 0.0
    %1366 = vmatpush1.msra.mxu0 0.0
    %1367 = vmatprep.subr.mxu0 0.0
    %1368 = vmatpush1.msra.mxu0 0.0
    %1369 = vmatprep.subr.mxu0 0.0
    %1370 = vmatpush1.msra.mxu0 0.0
    %1371 = vmatprep.subr.mxu0 0.0
    %1372 = vmatpush1.msra.mxu0 0.0
    %1373 = vmatprep.subr.mxu0 0.0
    %1374 = vmatpush1.msra.mxu0 0.0
    %1375 = vmatprep.subr.mxu0 0.0
    %1376 = vmatpush1.msra.mxu0 0.0
    %1377 = vmatprep.subr.mxu0 0.0
    %1378 = vmatpush1.msra.mxu0 0.0
    %1379 = vmatprep.subr.mxu0 0.0
    %1380 = vmatpush1.msra.mxu0 0.0
    %1381 = vmatprep.mubr.f32.mxu0 0.0
    %1382 = vmatmul.mubr.f32.gmra.mrb[0].mxu0 %v1315
    %v1383 = vpop.f32.mrb[0].mxu0
    %v1384 = vadd.f32 0.0, %v1383
    %v1385 = vpop.f32.mrb[0].mxu0
    %1386 = vdwg.mxu0
    %v1387 = vrcp.pop %v765
    %v1388 = vmul.f32 2.0, %v1387
    %v1389 = vrcp.pop %v768
    %v1390 = vmul.f32 2.0, %v1389
    %v1391 = vrcp.pop %v771
    %v1392 = vmul.f32 2.0, %v1391
    %v1393 = vrcp.pop %v774
    %v1394 = vmul.f32 2.0, %v1393
    %v1395 = vrcp.pop %v777
    %v1396 = vmul.f32 2.0, %v1395
    %v1397 = vrcp.pop %v780
    %v1398 = vmul.f32 2.0, %v1397
    %v1399 = vrcp.pop %v783
    %v1400 = vmul.f32 2.0, %v1399
    %v1401 = vrcp.pop %v786
    %v1402 = vmul.f32 2.0, %v1401
    %v1403 = vmul.f32 %v873, %v1388
    %v1404 = vmul.f32 %v946, %v1390
    %v1405 = vmul.f32 %v1019, %v1392
    %v1406 = vmul.f32 %v1092, %v1394
    %v1407 = vmul.f32 %v1165, %v1396
    %v1408 = vmul.f32 %v1238, %v1398
    %v1409 = vmul.f32 %v1311, %v1400
    %v1410 = vmul.f32 %v1384, %v1402
    %1411 = vst.msk [vmem:[#allocation10] sm:$0xff] %vm105, %v1403
    %1412 = vst.msk [vmem:[#allocation10 + $0x8] sm:$0xff] %vm105, %v1404
    %1413 = vst.msk [vmem:[#allocation10 + $0x10] sm:$0xff] %vm105, %v1405
    %1414 = vst.msk [vmem:[#allocation10 + $0x18] sm:$0xff] %vm105, %v1406
    %1415 = vst.msk [vmem:[#allocation10 + $0x20] sm:$0xff] %vm105, %v1407
    %1416 = vst.msk [vmem:[#allocation10 + $0x28] sm:$0xff] %vm105, %v1408
    %1417 = vst.msk [vmem:[#allocation10 + $0x30] sm:$0xff] %vm105, %v1409
    %1418 = vst.msk [vmem:[#allocation10 + $0x38] sm:$0xff] %vm105, %v1410
    // Predicated region
    $region34: #{tpu_custom_call.1} parent=1 // pred_check
      _
    $region35: #{tpu_custom_call.1} parent=1 // pred_check_branch
      %1420 = sbr.rel (0) target = $region37
    $region36: #{tpu_custom_call.1} parent=1 // pred_region
      %s1422 = ssub.s32 1024, 1024
      %1423 = vsyncadd [#allocation4], %s1422
      %s1424 = sshll.u32 [#allocation10], 4
      %s1425 = int_to_ptr.vmem [resolvable:$true] %s1424
      %1430 = dma.vmem_to_hbm [thread:$0]  %s1425, 1024, %s4, [#allocation4], 128, 128, 8
    $region37: #{tpu_custom_call.1} parent=1 // pred_fallthru
      _
    // Predicated region
    $region38: #{tpu_custom_call.1} parent=1 // pred_check
      _
    $region39: #{tpu_custom_call.1} parent=1 // pred_check_branch
      %1432 = sbr.rel (0) target = $region41
    $region40: #{tpu_custom_call.1} parent=1 // pred_region
      %1433 = dma.done [#allocation4], 1024
    $region41: #{tpu_custom_call.1} parent=1 // pred_fallthru
      _
    %1434 = vsyncpa [#allocation3], 1
    %1435 = vsyncpa [#allocation6], 1
    %1436 = vsyncpa [#allocation9], 1
    %1437 = vsyncpa [#allocation4], 1

</llo_original>
